<compile_context>
chip_gen: v6e
topology: v6e:2x2x1
jax: 0.10.0
libtpu: 0.0.40
codegen_flags: <defaults>
</compile_context>

<pallas_src>
import functools
import math

import jax
import jax.numpy as jnp
from jax.experimental import pallas as pl
from jax.experimental.pallas import tpu as pltpu

SECONDS_PER_DAY = 86400
SECONDS_PER_HOUR = 3600
# sunrise='06:00:00' -> 21600 s, sunset='18:00:00' -> 64800 s (module defaults)
SUNRISE = 6 * 3600
SUNSET = 18 * 3600

_VMEM_LIMIT = 32 * 1024 * 1024


def _filter_packed_kernel(ts_ref, expand_ref, feat_ref, out_ref, *, day_lo, day_hi):
    # ts_ref:     (TM, P)   int32   P original rows per packed row
    # expand_ref: (P, PD)   float32 one-hot expansion (packed-row -> lane block)
    # feat_ref:   (TM, PD)  feature dtype
    tod = ts_ref[...] % SECONDS_PER_DAY
    is_day = jnp.logical_and(tod >= day_lo, tod < day_hi)
    # Expand the (TM, P) mask to the packed (TM, PD) lane layout with a tiny
    # MXU matmul (exact 0.0 / 1.0 values) -> no cross-lane relayout on the VPU.
    mask = jnp.dot(is_day.astype(jnp.float32), expand_ref[...],
                   preferred_element_type=jnp.float32)
    feat = feat_ref[...]
    out_ref[...] = jnp.where(mask > 0.5, feat, jnp.zeros_like(feat))


def _filter_rows_kernel(ts_ref, feat_ref, out_ref, *, day_lo, day_hi):
    # ts_ref:   (TM, 1) int32 ; feat_ref/out_ref: (TM, W)
    tod = ts_ref[...] % SECONDS_PER_DAY
    is_day = jnp.logical_and(tod >= day_lo, tod < day_hi)  # (TM, 1), broadcasts
    feat = feat_ref[...]
    out_ref[...] = jnp.where(is_day, feat, jnp.zeros_like(feat))


def _row_tile(M, W, itemsize, target_block_bytes):
    rows_target = max(8, (target_block_bytes // max(1, W * itemsize)) // 8 * 8)
    TM = int(min(rows_target, -(-M // 8) * 8))
    M_pad = -(-M // TM) * TM
    return TM, M_pad


def filter_mechanism(timestamp, feature, *, sunrise=SUNRISE, sunset=SUNSET,
                     target_block_bytes=2 * 1024 * 1024):
    """Pallas equivalent of FilterMechanism.forward.

    timestamp: (B, S) integer unix timestamps
    feature:   (B, S, D) floats
    returns:   (B, S, D) with rows zeroed where the hour-floored time-of-day
               falls outside [sunrise, sunset] (matches the torch module).
    """
    B, S = timestamp.shape
    D = feature.shape[-1]
    N = B * S
    dtype = feature.dtype
    itemsize = jnp.dtype(dtype).itemsize

    # torch:  tod_h = (ts % 86400) // 3600 * 3600 ; day <=> sunrise <= tod_h <= sunset
    # Fold the hour-floor into compile-time thresholds on the raw time-of-day:
    #   day  <=>  day_lo <= (ts % 86400) < day_hi
    day_lo = -(-sunrise // SECONDS_PER_HOUR) * SECONDS_PER_HOUR
    day_hi = (sunset // SECONDS_PER_HOUR + 1) * SECONDS_PER_HOUR

    ts_flat = timestamp.reshape(N)
    if ts_flat.dtype != jnp.int32:
        # Reduce to time-of-day before the int32 cast so int64 timestamps
        # (past 2038 / negative) stay exact; result always fits in int32.
        ts_flat = (ts_flat % SECONDS_PER_DAY).astype(jnp.int32)
    feat_flat = feature.reshape(N, D)

    # Lane packing factor: P rows per packed row so PD = P*D is a multiple of 128.
    P = 128 // math.gcd(D, 128)
    PD = P * D
    use_packed = (P > 1 and P * PD * 4 <= (1 << 21) and PD <= (1 << 15))

    compiler_params = pltpu.CompilerParams(
        dimension_semantics=("parallel",),
        vmem_limit_bytes=_VMEM_LIMIT,
    )

    if use_packed:
        M = -(-N // P)
        TM, M_pad = _row_tile(M, PD, itemsize, target_block_bytes)
        N_pad = M_pad * P
        if N_pad != N:
            # tod=0 -> night -> zeroed, then dropped below.
            ts_flat = jnp.pad(ts_flat, (0, N_pad - N))
            feat_flat = jnp.pad(feat_flat, ((0, N_pad - N), (0, 0)))
        ts_in = ts_flat.reshape(M_pad, P)
        feat_in = feat_flat.reshape(M_pad, PD)
        # expand[p, p*D + d] = 1.0 : packed-row mask -> packed lane layout.
        expand = (
            jnp.arange(PD, dtype=jnp.int32)[None, :] // D
            == jnp.arange(P, dtype=jnp.int32)[:, None]
        ).astype(jnp.float32)

        out = pl.pallas_call(
            functools.partial(_filter_packed_kernel, day_lo=day_lo, day_hi=day_hi),
            out_shape=jax.ShapeDtypeStruct((M_pad, PD), dtype),
            grid_spec=pltpu.PrefetchScalarGridSpec(
                num_scalar_prefetch=0,
                grid=(M_pad // TM,),
                in_specs=[
                    pl.BlockSpec((TM, P), lambda i: (i, 0)),
                    pl.BlockSpec((P, PD), lambda i: (0, 0)),  # resident constant
                    pl.BlockSpec((TM, PD), lambda i: (i, 0)),
                ],
                out_specs=pl.BlockSpec((TM, PD), lambda i: (i, 0)),
            ),
            compiler_params=compiler_params,
            cost_estimate=pl.CostEstimate(
                flops=2 * M_pad * P * PD,
                transcendentals=0,
                bytes_accessed=2 * M_pad * PD * itemsize + M_pad * P * 4,
            ),
        )(ts_in, expand, feat_in)

        out = out.reshape(N_pad, D)
        if N_pad != N:
            out = out[:N]
        return out.reshape(B, S, D)

    # Row-mask path: used when D is already a multiple of 128 (P == 1, stores
    # stay lane-dense) or as a fallback when the packed expand matrix would be
    # too large for VMEM.
    # TODO(synk): in the large-odd-D fallback the ragged tail of D causes
    # lane-masked stores; a D-padding pass would recover full store width.
    TM, M_pad = _row_tile(N, D, itemsize, target_block_bytes)
    if M_pad != N:
        ts_flat = jnp.pad(ts_flat, (0, M_pad - N))
        feat_flat = jnp.pad(feat_flat, ((0, M_pad - N), (0, 0)))
    ts_in = ts_flat.reshape(M_pad, 1)

    out = pl.pallas_call(
        functools.partial(_filter_rows_kernel, day_lo=day_lo, day_hi=day_hi),
        out_shape=jax.ShapeDtypeStruct((M_pad, D), dtype),
        grid_spec=pltpu.PrefetchScalarGridSpec(
            num_scalar_prefetch=0,
            grid=(M_pad // TM,),
            in_specs=[
                pl.BlockSpec((TM, 1), lambda i: (i, 0)),
                pl.BlockSpec((TM, D), lambda i: (i, 0)),
            ],
            out_specs=pl.BlockSpec((TM, D), lambda i: (i, 0)),
        ),
        compiler_params=compiler_params,
        cost_estimate=pl.CostEstimate(
            flops=0,
            transcendentals=0,
            bytes_accessed=2 * M_pad * D * itemsize + M_pad * 4,
        ),
    )(ts_in, feat_flat)

    if M_pad != N:
        out = out[:N]
    return out.reshape(B, S, D)


def _reference(timestamp, feature):
    # Mirrors the PyTorch forward exactly (long-form hour-floor math).
    ts = timestamp.astype(jnp.int32)
    tod = ((ts - (ts // SECONDS_PER_DAY) * SECONDS_PER_DAY)
           // SECONDS_PER_HOUR) * SECONDS_PER_HOUR
    is_night = jnp.logical_or(tod < SUNRISE, tod > SUNSET)
    is_day = jnp.logical_not(is_night)[..., None]
    return jnp.where(is_day, feature, jnp.zeros_like(feature))


if __name__ == "__main__":
    key = jax.random.PRNGKey(0)
    k1, k2 = jax.random.split(key)

    B, S, D = 2, 8, 32
    # deterministic unix-like timestamps spanning both day and night hours
    timestamps = jax.random.randint(
        k1, (B, S), minval=1_600_000_000, maxval=1_600_000_000 + 7 * 86400,
        dtype=jnp.int32,
    )
    features = jax.random.normal(k2, (B, S, D), dtype=jnp.float32)

    out = filter_mechanism(timestamps, features)
    out = jax.block_until_ready(out)

    ref = _reference(timestamps, features)
    assert out.shape == (B, S, D)
    assert jnp.allclose(out, ref), "Pallas output mismatch vs reference"

    # Also exercise the D % 128 == 0 (row-mask, P == 1) path.
    D2 = 128
    features2 = jax.random.normal(k2, (B, S, D2), dtype=jnp.float32)
    out2 = jax.block_until_ready(filter_mechanism(timestamps, features2))
    assert jnp.allclose(out2, _reference(timestamps, features2)), "P==1 path mismatch"

    print("KERNEL_OK")
</pallas_src>

<mosaic_0001>
module attributes {stable_mosaic.version = 11 : i64} {
  func.func @_filter_packed_kernel(%arg0: i32, %arg1: memref<8x4xi32, #tpu.memory_space<vmem>>, %arg2: memref<4x128xf32, #tpu.memory_space<vmem>>, %arg3: memref<8x128xf32, #tpu.memory_space<vmem>>, %arg4: memref<8x128xf32, #tpu.memory_space<vmem>>) attributes {dimension_semantics = [#tpu.dimension_semantics<parallel>], iteration_bounds = array<i64: 1>, scalar_prefetch = 0 : i64, scratch_operands = 0 : i64, tpu.core_type = #tpu.core_type<tc>, window_params = [{transform_indices = @transform_0, window_bounds = array<i64: 8, 4>}, {pipeline_mode = #tpu.pipeline_mode<synchronous>, transform_indices = @transform_1, window_bounds = array<i64: 4, 128>}, {transform_indices = @transform_2, window_bounds = array<i64: 8, 128>}, {transform_indices = @transform_3, window_bounds = array<i64: 8, 128>}]} {
    %c0 = arith.constant 0 : index
    %c0_0 = arith.constant 0 : index
    %0 = vector.load %arg1[%c0, %c0_0] : memref<8x4xi32, #tpu.memory_space<vmem>>, vector<8x4xi32>
    %c86400_i32 = arith.constant 86400 : i32
    %c0_i32 = arith.constant 0 : i32
    %1 = arith.cmpi eq, %c86400_i32, %c0_i32 : i32
    %c1_i32 = arith.constant 1 : i32
    %2 = arith.select %1, %c1_i32, %c86400_i32 : i32
    %3 = vector.broadcast %2 : i32 to vector<8x4xi32>
    %4 = arith.remsi %0, %3 : vector<8x4xi32>
    %c0_i32_1 = arith.constant 0 : i32
    %5 = vector.broadcast %c0_i32_1 : i32 to vector<8x4xi32>
    %6 = arith.cmpi ne, %4, %5 : vector<8x4xi32>
    %c0_i32_2 = arith.constant 0 : i32
    %7 = vector.broadcast %c0_i32_2 : i32 to vector<8x4xi32>
    %8 = arith.cmpi slt, %4, %7 : vector<8x4xi32>
    %c0_i32_3 = arith.constant 0 : i32
    %9 = arith.cmpi slt, %2, %c0_i32_3 : i32
    %10 = vector.broadcast %9 : i1 to vector<8x4xi1>
    %11 = vector.broadcast %10 : vector<8x4xi1> to vector<8x4xi1>
    %12 = arith.xori %8, %11 : vector<8x4xi1>
    %13 = arith.andi %12, %6 : vector<8x4xi1>
    %14 = vector.broadcast %2 : i32 to vector<8x4xi32>
    %15 = arith.addi %4, %14 : vector<8x4xi32>
    %16 = arith.select %13, %15, %4 : vector<8x4xi1>, vector<8x4xi32>
    %c21600_i32 = arith.constant 21600 : i32
    %17 = vector.broadcast %c21600_i32 : i32 to vector<8x4xi32>
    %18 = arith.cmpi sge, %16, %17 : vector<8x4xi32>
    %c68400_i32 = arith.constant 68400 : i32
    %19 = vector.broadcast %c68400_i32 : i32 to vector<8x4xi32>
    %20 = arith.cmpi slt, %16, %19 : vector<8x4xi32>
    %21 = arith.andi %18, %20 : vector<8x4xi1>
    %22 = arith.extui %21 : vector<8x4xi1> to vector<8x4xi32>
    %23 = arith.sitofp %22 : vector<8x4xi32> to vector<8x4xf32>
    %c0_4 = arith.constant 0 : index
    %c0_5 = arith.constant 0 : index
    %24 = vector.load %arg2[%c0_4, %c0_5] : memref<4x128xf32, #tpu.memory_space<vmem>>, vector<4x128xf32>
    %cst = arith.constant dense<0.000000e+00> : vector<8x128xf32>
    %25 = tpu.matmul %23, %24, %cst {dimension_numbers = #tpu.dot_dimension_numbers<[1], [0], [0], [1], [0, 0, 1, 1], [], []>} : vector<8x4xf32>, vector<4x128xf32>, vector<8x128xf32> -> vector<8x128xf32>
    %c0_6 = arith.constant 0 : index
    %c0_7 = arith.constant 0 : index
    %26 = vector.load %arg3[%c0_6, %c0_7] : memref<8x128xf32, #tpu.memory_space<vmem>>, vector<8x128xf32>
    %cst_8 = arith.constant 5.000000e-01 : f32
    %27 = vector.broadcast %cst_8 : f32 to vector<8x128xf32>
    %28 = arith.cmpf ogt, %25, %27 : vector<8x128xf32>
    %cst_9 = arith.constant 0.000000e+00 : f32
    %29 = vector.broadcast %cst_9 : f32 to vector<8x128xf32>
    %30 = arith.select %28, %26, %29 : vector<8x128xi1>, vector<8x128xf32>
    %c0_10 = arith.constant 0 : index
    %c0_11 = arith.constant 0 : index
    %31 = vector.load %arg4[%c0_10, %c0_11] : memref<8x128xf32, #tpu.memory_space<vmem>>, vector<8x128xf32>
    tpu.vector_store %arg4[%c0_10, %c0_11], %30 {strides = array<i32>} : memref<8x128xf32, #tpu.memory_space<vmem>>, vector<8x128xf32>,
    return
  }
  func.func @transform_0(%arg0: i32) -> (i32, i32) {
    %c0_i32 = arith.constant 0 : i32
    %c0_i32_0 = arith.constant 0 : i32
    return %arg0, %c0_i32 : i32, i32
  }
  func.func @transform_1(%arg0: i32) -> (i32, i32) {
    %c0_i32 = arith.constant 0 : i32
    %c0_i32_0 = arith.constant 0 : i32
    %c0_i32_1 = arith.constant 0 : i32
    return %c0_i32, %c0_i32_0 : i32, i32
  }
  func.func @transform_2(%arg0: i32) -> (i32, i32) {
    %c0_i32 = arith.constant 0 : i32
    %c0_i32_0 = arith.constant 0 : i32
    return %arg0, %c0_i32 : i32, i32
  }
  func.func @transform_3(%arg0: i32) -> (i32, i32) {
    %c0_i32 = arith.constant 0 : i32
    %c0_i32_0 = arith.constant 0 : i32
    return %arg0, %c0_i32 : i32, i32
  }
}

</mosaic_0001>

<llo_original>
// kernel: tpu_custom_call.1
$region0: #{tpu_custom_call.1}
  #allocation0 [shape = 'u32[]', space=smem, size = 0x4, offset = 0x4, fixed_abs, tag = 'smem constant byte address 0x4 - core index']
  #allocation1 [shape = 'u32[144,128]{1,0:T(1,128)}', space=vmem, size = 0x12000, scoped, tag = 'internal scratch']
  %s0 = inlined_call_operand.vmem [shape: s32[8,4], index: 0, kind: input, shape index: {}]
  %s1 = inlined_call_operand.vmem [shape: f32[4,128], index: 1, kind: input, shape index: {}]
  %s2 = inlined_call_operand.vmem [shape: f32[8,128], index: 2, kind: input, shape index: {}]
  %s3 = inlined_call_operand.hbm [shape: f32[8,128], index: 3, kind: output, shape index: {}]
  %s4 = sld [smem:[#allocation0]]
  $region22: #{tpu_custom_call.1} parent=0
    _
  %s6 = ssub.s32 1, %s4
  %s7 = scalar_select 0, %s6, %s4
  $region1: #{tpu_custom_call.1} parent=0
    #allocation2 [shape = 'u8[4096]{0}', space=vmem, size = 0x1000, scoped, tag = 'output window, operand 0, single buffered']
    #allocation3 [shape = 's32[1]{0}', space=sflag, size = 0x4, scoped, tag = 'scoped memory for tpu_custom_call.1']
    %8 = vsyncpa [#allocation3], 0
    // Predicated region
    $region2: #{tpu_custom_call.1} parent=1 // pred_check
      _
    $region3: #{tpu_custom_call.1} parent=1 // pred_check_branch
      %10 = sbr.rel (0) target = $region5
    $region4: #{tpu_custom_call.1} parent=1 // pred_region
      _
    $region5: #{tpu_custom_call.1} parent=1 // pred_fallthru
      _
    // Predicated region
    $region6: #{tpu_custom_call.1} parent=1 // pred_check
      _
    $region7: #{tpu_custom_call.1} parent=1 // pred_check_branch
      %12 = sbr.rel (0) target = $region9
    $region8: #{tpu_custom_call.1} parent=1 // pred_region
      _
    $region9: #{tpu_custom_call.1} parent=1 // pred_fallthru
      _
    // Predicated region
    $region10: #{tpu_custom_call.1} parent=1 // pred_check
      _
    $region11: #{tpu_custom_call.1} parent=1 // pred_check_branch
      %14 = sbr.rel (0) target = $region13
    $region12: #{tpu_custom_call.1} parent=1 // pred_region
      _
    $region13: #{tpu_custom_call.1} parent=1 // pred_fallthru
      _
    %v15 = vld [vmem:[%s0] sm:$0xff]
    %vm16 = vcmp.lt.s32.totalorder %v15, 0
    %v17 = vsub.s32 0, %v15
    %v18 = vsel %vm16, %v17, %v15
    %v19 = vmul.u32.u64.compose %v18, 3257812231
    %v20 = vextract.low.u32 %v19
    %v21 = vextract.high.u32 %v19
    %v22 = vshrl.u32 %v21, 16
    %v23 = vmul.u32 %v22, 86400
    %v24 = vsub.s32 %v18, %v23
    %v25 = vsub.s32 0, %v24
    %v26 = vsel %vm16, %v25, %v24
    %vm27 = vcmp.ne.s32.totalorder %v26, 0
    %vm28 = vcmp.lt.s32.totalorder %v26, 0
    %vm29 = vmand %vm28, %vm27
    %v30 = vadd.s32 %v26, 86400
    %v31 = vsel %vm29, %v30, %v26
    %vm32 = vcmp.ge.s32.totalorder %v31, 21600
    %vm33 = vcmp.lt.s32.totalorder %v31, 68400
    %vm34 = vmand %vm32, %vm33
    %v35 = vsel %vm34, 1, 0
    %v36 = vcvt.s32.f32 %v35
    %v37 = vld [vmem:[%s1] sm:$0xf]
    %vm38 = vcmask 31744
    %v40 = vsel %vm38, %v36, 0
    %vm42 = vcmask 1043456
    %v44 = vsel %vm42, %v37, 0
    %46 = vmatprep.subr.mxu0 0.0
    %47 = vmatpush1.msra.mxu0 0.0
    %48 = vmatprep.subr.mxu0 0.0
    %49 = vmatpush1.msra.mxu0 0.0
    %50 = vmatprep.subr.mxu0 0.0
    %51 = vmatpush1.msra.mxu0 0.0
    %52 = vmatprep.subr.mxu0 0.0
    %53 = vmatpush1.msra.mxu0 0.0
    %54 = vmatprep.subr.mxu0 0.0
    %55 = vmatpush1.msra.mxu0 0.0
    %56 = vmatprep.subr.mxu0 0.0
    %57 = vmatpush1.msra.mxu0 0.0
    %58 = vmatprep.subr.mxu0 0.0
    %59 = vmatpush1.msra.mxu0 0.0
    %60 = vmatprep.subr.mxu0 0.0
    %61 = vmatpush1.msra.mxu0 0.0
    %62 = vmatprep.subr.mxu0 0.0
    %63 = vmatpush1.msra.mxu0 0.0
    %64 = vmatprep.subr.mxu0 0.0
    %65 = vmatpush1.msra.mxu0 0.0
    %66 = vmatprep.subr.mxu0 0.0
    %67 = vmatpush1.msra.mxu0 0.0
    %68 = vmatprep.subr.mxu0 0.0
    %69 = vmatpush1.msra.mxu0 0.0
    %70 = vmatprep.subr.mxu0 0.0
    %71 = vmatpush1.msra.mxu0 0.0
    %72 = vmatprep.subr.mxu0 0.0
    %73 = vmatpush1.msra.mxu0 0.0
    %74 = vmatprep.subr.mxu0 0.0
    %75 = vmatpush1.msra.mxu0 0.0
    %76 = vmatprep.subr.mxu0 0.0
    %77 = vmatpush1.msra.mxu0 %v44
    %78 = vmatprep.subr.mxu0 0.0
    %79 = vmatpush2.msra.mxu0 0.0
    %80 = vmatprep.subr.mxu0 0.0
    %81 = vmatpush2.msra.mxu0 0.0
    %82 = vmatprep.subr.mxu0 0.0
    %83 = vmatpush2.msra.mxu0 0.0
    %84 = vmatprep.subr.mxu0 0.0
    %85 = vmatpush2.msra.mxu0 0.0
    %86 = vmatprep.subr.mxu0 0.0
    %87 = vmatpush2.msra.mxu0 0.0
    %88 = vmatprep.subr.mxu0 0.0
    %89 = vmatpush2.msra.mxu0 0.0
    %90 = vmatprep.subr.mxu0 0.0
    %91 = vmatpush2.msra.mxu0 0.0
    %92 = vmatprep.subr.mxu0 0.0
    %93 = vmatpush2.msra.mxu0 0.0
    %94 = vmatprep.subr.mxu0 0.0
    %95 = vmatpush2.msra.mxu0 0.0
    %96 = vmatprep.subr.mxu0 0.0
    %97 = vmatpush2.msra.mxu0 0.0
    %98 = vmatprep.subr.mxu0 0.0
    %99 = vmatpush2.msra.mxu0 0.0
    %100 = vmatprep.subr.mxu0 0.0
    %101 = vmatpush2.msra.mxu0 0.0
    %102 = vmatprep.subr.mxu0 0.0
    %103 = vmatpush2.msra.mxu0 0.0
    %104 = vmatprep.subr.mxu0 0.0
    %105 = vmatpush2.msra.mxu0 0.0
    %106 = vmatprep.subr.mxu0 0.0
    %107 = vmatpush2.msra.mxu0 0.0
    %108 = vmatprep.subr.mxu0 0.0
    %109 = vmatpush2.msra.mxu0 0.0
    %110 = vmatprep.mubr.f32.mxu0 0.0
    %111 = vmatmul.mubr.f32.gmra.mxu0 %v40
    %v112 = vpop.f32.mrf.mxu0
    %v113 = vadd.f32 0.0, %v112
    %v114 = vpop.f32.mrf.mxu0
    %115 = vdwg.mxu0
    %v116 = vld [vmem:[%s2] sm:$0xff]
    %vm117 = vcmp.gt.f32.partialorder %v113, 0.5
    %v118 = vsel %vm117, %v116, 0.0
    %119 = vst [vmem:[#allocation2] sm:$0xff] %v118
    // Predicated region
    $region14: #{tpu_custom_call.1} parent=1 // pred_check
      _
    $region15: #{tpu_custom_call.1} parent=1 // pred_check_branch
      %121 = sbr.rel (0) target = $region17
    $region16: #{tpu_custom_call.1} parent=1 // pred_region
      %s123 = ssub.s32 128, 128
      %124 = vsyncadd [#allocation3], %s123
      %s126 = sshll.u32 [#allocation2], 4
      %s127 = int_to_ptr.vmem [resolvable:$true] %s126
      %129 = dma.vmem_to_hbm [thread:$0]  %s127, 128, %s3, [#allocation3]
    $region17: #{tpu_custom_call.1} parent=1 // pred_fallthru
      _
    // Predicated region
    $region18: #{tpu_custom_call.1} parent=1 // pred_check
      _
    $region19: #{tpu_custom_call.1} parent=1 // pred_check_branch
      %131 = sbr.rel (0) target = $region21
    $region20: #{tpu_custom_call.1} parent=1 // pred_region
      %132 = dma.done [#allocation3], 128
    $region21: #{tpu_custom_call.1} parent=1 // pred_fallthru
      _
    %133 = vsyncpa [#allocation3], 1

</llo_original>
